<compile_context>
chip_gen: v6e
topology: v6e:2x2x1
jax: 0.10.0
libtpu: 0.0.40
codegen_flags: <defaults>
</compile_context>

<pallas_src>
import functools

import jax
import jax.numpy as jnp
from jax.experimental import pallas as pl
from jax.experimental.pallas import tpu as pltpu

HIDDEN_SIZE = 256


def _round_up(x, m):
    return ((x + m - 1) // m) * m


def actor_critic_kernel(x_ref, w1_ref, b1_ref, w2_ref, b2_ref, wh_ref, bh_ref,
                        out_ref, *, num_actions):
    bf16 = jnp.bfloat16

    # Shared MLP trunk: two Linear+ReLU layers. bf16 operands, f32 accumulation.
    x = x_ref[...]                                              # bf16 [tile_b, in_w]
    h1 = jnp.dot(x, w1_ref[...], preferred_element_type=jnp.float32) + b1_ref[...]
    h1 = jnp.maximum(h1, 0.0)
    h2 = jnp.dot(h1.astype(bf16), w2_ref[...],
                 preferred_element_type=jnp.float32) + b2_ref[...]
    h2 = jnp.maximum(h2, 0.0)

    # Fused actor+critic heads: one narrow [tile_b, head_w] matmul.
    heads = jnp.dot(h2.astype(bf16), wh_ref[...],
                    preferred_element_type=jnp.float32) + bh_ref[...]

    # Softmax over the action lanes only; value/padded lanes are masked out.
    col = jax.lax.broadcasted_iota(jnp.int32, heads.shape, 1)
    is_action = col < num_actions
    logits = jnp.where(is_action, heads, jnp.float32(-1e30))
    m = jnp.max(logits, axis=-1, keepdims=True)
    e = jnp.exp(logits - m)
    denom = jnp.sum(e, axis=-1, keepdims=True)
    probs = e / denom                                           # exact division

    # Output slab: probs in lanes [0, A), critic value in lane A, zeros beyond.
    out_ref[...] = jnp.where(is_action, probs, heads).astype(out_ref.dtype)


def actor_critic_forward(x, params, num_actions, *, tile_b=None):
    """Fused ActorCritic forward. Returns (action_probs [B,A], value [B,1])."""
    if x.ndim == 1:
        x = x[None, :]
    w1, b1, w2, b2, wh, bh = params
    B, in_features = x.shape
    in_w = w1.shape[0]          # in_features rounded up to a sublane multiple
    hidden = w1.shape[1]
    head_w = wh.shape[1]        # round_up(num_actions + 1, 8)

    if tile_b is None:
        b8 = _round_up(max(B, 1), 8)
        if b8 <= 256:
            tile_b = b8         # small batch: single step, minimal padding
        else:
            # Large batch: big tiles to amortize per-step overhead and deepen
            # the DMA pipeline, but keep >= 2 grid steps so the "parallel"
            # batch axis can be split across v7x's two TensorCores.
            tile_b = min(1024, _round_up(pl.cdiv(b8, 2), 128))
    b_pad = _round_up(B, tile_b)
    n_steps = b_pad // tile_b

    # Cast to bf16 and pad batch (and features only up to the sublane-rounded
    # width) in one fused wrapper pass.  Padded rows/features are zeros.
    x_p = jnp.pad(x.astype(jnp.bfloat16),
                  ((0, b_pad - B), (0, in_w - in_features)))

    kernel = functools.partial(actor_critic_kernel, num_actions=num_actions)

    cost = pl.CostEstimate(
        flops=2 * b_pad * (in_w * hidden + hidden * hidden + hidden * head_w),
        transcendentals=b_pad * head_w,
        bytes_accessed=(b_pad * in_w * 2                       # x (bf16)
                        + (in_w + hidden) * hidden * 2          # w1, w2 (bf16)
                        + hidden * head_w * 2                   # wh (bf16)
                        + (2 * hidden + head_w) * 4             # biases (f32)
                        + b_pad * head_w * 4),                  # out (f32)
    )

    out = pl.pallas_call(
        kernel,
        out_shape=jax.ShapeDtypeStruct((b_pad, head_w), jnp.float32),
        grid=(n_steps,),
        in_specs=[
            pl.BlockSpec((tile_b, in_w), lambda i: (i, 0)),     # x: batch-tiled
            pl.BlockSpec((in_w, hidden), lambda i: (0, 0)),     # w1 (VMEM-resident)
            pl.BlockSpec((1, hidden), lambda i: (0, 0)),        # b1
            pl.BlockSpec((hidden, hidden), lambda i: (0, 0)),   # w2
            pl.BlockSpec((1, hidden), lambda i: (0, 0)),        # b2
            pl.BlockSpec((hidden, head_w), lambda i: (0, 0)),   # fused heads W
            pl.BlockSpec((1, head_w), lambda i: (0, 0)),        # fused heads b
        ],
        out_specs=pl.BlockSpec((tile_b, head_w), lambda i: (i, 0)),
        compiler_params=pltpu.CompilerParams(
            dimension_semantics=("parallel",),
        ),
        cost_estimate=cost,
    )(x_p, w1, b1, w2, b2, wh, bh)

    probs = out[:B, :num_actions]
    value = out[:B, num_actions:num_actions + 1]
    return probs, value


def _orthogonal(key, shape, gain=1.0):
    """Deterministic orthogonal init (same spirit as nn.init.orthogonal_)."""
    rows, cols = shape
    n = max(rows, cols)
    a = jax.random.normal(key, (n, n), dtype=jnp.float32)
    q, r = jnp.linalg.qr(a)
    q = q * jnp.sign(jnp.diag(r))[None, :]
    return (gain * q[:rows, :cols]).astype(jnp.float32)


def init_params(key, input_size, num_actions):
    """Build kernel-layout params: sublane-rounded, pre-transposed, bf16 weights."""
    k1, k2, k3, k4 = jax.random.split(key, 4)
    in_w = _round_up(input_size, 8)            # sublane-rounded feature width
    head_w = _round_up(num_actions + 1, 8)     # narrow fused-head width

    # PyTorch Linear weights are (out, in); store transposed (in, out) for x @ W.
    w1 = _orthogonal(k1, (HIDDEN_SIZE, input_size)).T            # [in, 256]
    w1 = jnp.pad(w1, ((0, in_w - input_size), (0, 0)))           # zero rows for padded feats
    w2 = _orthogonal(k2, (HIDDEN_SIZE, HIDDEN_SIZE)).T           # [256, 256]
    wa = _orthogonal(k3, (num_actions, HIDDEN_SIZE), gain=0.01).T  # [256, A]
    wc = _orthogonal(k4, (1, HIDDEN_SIZE), gain=1.0).T             # [256, 1]

    # Fused head weight: actor lanes [0, A), critic lane A, zeros beyond.
    wh = jnp.zeros((HIDDEN_SIZE, head_w), jnp.float32)
    wh = wh.at[:, :num_actions].set(wa)
    wh = wh.at[:, num_actions:num_actions + 1].set(wc)

    b1 = jnp.zeros((1, HIDDEN_SIZE), jnp.float32)
    b2 = jnp.zeros((1, HIDDEN_SIZE), jnp.float32)
    bh = jnp.zeros((1, head_w), jnp.float32)

    bf16 = jnp.bfloat16
    return (w1.astype(bf16), b1, w2.astype(bf16), b2, wh.astype(bf16), bh)


def _reference(x, params, num_actions):
    """Plain-JAX reference emulating the kernel's bf16-operand / f32-accum math."""
    w1, b1, w2, b2, wh, bh = params

    def mm(a, w):
        return jnp.dot(a.astype(jnp.bfloat16), w,
                       preferred_element_type=jnp.float32)

    in_w = w1.shape[0]
    x_p = jnp.pad(x.astype(jnp.float32), ((0, 0), (0, in_w - x.shape[1])))
    h = jnp.maximum(mm(x_p, w1) + b1, 0.0)
    h = jnp.maximum(mm(h, w2) + b2, 0.0)
    heads = mm(h, wh) + bh
    probs = jax.nn.softmax(heads[:, :num_actions], axis=-1)
    value = heads[:, num_actions:num_actions + 1]
    return probs, value


if __name__ == "__main__":
    key = jax.random.PRNGKey(0)
    kx, kp = jax.random.split(key)

    B, INPUT_SIZE, NUM_ACTIONS = 2, 16, 4
    x = jax.random.normal(kx, (B, INPUT_SIZE), dtype=jnp.float32)
    params = init_params(kp, INPUT_SIZE, NUM_ACTIONS)

    probs, value = actor_critic_forward(x, params, NUM_ACTIONS)
    probs = jax.block_until_ready(probs)
    value = jax.block_until_ready(value)

    # Sanity check against a plain-JAX reference of the same math.
    ref_probs, ref_value = _reference(x, params, NUM_ACTIONS)
    assert probs.shape == (B, NUM_ACTIONS) and value.shape == (B, 1)
    assert jnp.allclose(probs, ref_probs, atol=2e-3, rtol=2e-3)
    assert jnp.allclose(value, ref_value, atol=2e-3, rtol=2e-3)
    assert jnp.allclose(jnp.sum(probs, axis=-1), 1.0, atol=1e-5)

    print("KERNEL_OK")
</pallas_src>

<mosaic_0001>
module attributes {stable_mosaic.version = 11 : i64} {
  func.func @actor_critic_kernel(%arg0: i32, %arg1: memref<8x16xbf16, #tpu.memory_space<vmem>>, %arg2: memref<16x256xbf16, #tpu.memory_space<vmem>>, %arg3: memref<1x256xf32, #tpu.memory_space<vmem>>, %arg4: memref<256x256xbf16, #tpu.memory_space<vmem>>, %arg5: memref<1x256xf32, #tpu.memory_space<vmem>>, %arg6: memref<256x8xbf16, #tpu.memory_space<vmem>>, %arg7: memref<1x8xf32, #tpu.memory_space<vmem>>, %arg8: memref<8x8xf32, #tpu.memory_space<vmem>>) attributes {dimension_semantics = [#tpu.dimension_semantics<parallel>], iteration_bounds = array<i64: 1>, scalar_prefetch = 0 : i64, scratch_operands = 0 : i64, tpu.core_type = #tpu.core_type<tc>, window_params = [{transform_indices = @transform_0, window_bounds = array<i64: 8, 16>}, {pipeline_mode = #tpu.pipeline_mode<synchronous>, transform_indices = @transform_1, window_bounds = array<i64: 16, 256>}, {pipeline_mode = #tpu.pipeline_mode<synchronous>, transform_indices = @transform_2, window_bounds = array<i64: 1, 256>}, {pipeline_mode = #tpu.pipeline_mode<synchronous>, transform_indices = @transform_3, window_bounds = array<i64: 256, 256>}, {pipeline_mode = #tpu.pipeline_mode<synchronous>, transform_indices = @transform_4, window_bounds = array<i64: 1, 256>}, {pipeline_mode = #tpu.pipeline_mode<synchronous>, transform_indices = @transform_5, window_bounds = array<i64: 256, 8>}, {pipeline_mode = #tpu.pipeline_mode<synchronous>, transform_indices = @transform_6, window_bounds = array<i64: 1, 8>}, {transform_indices = @transform_7, window_bounds = array<i64: 8, 8>}]} {
    %c0 = arith.constant 0 : index
    %c0_0 = arith.constant 0 : index
    %0 = vector.load %arg1[%c0, %c0_0] : memref<8x16xbf16, #tpu.memory_space<vmem>>, vector<8x16xbf16>
    %c0_1 = arith.constant 0 : index
    %c0_2 = arith.constant 0 : index
    %1 = vector.load %arg2[%c0_1, %c0_2] : memref<16x256xbf16, #tpu.memory_space<vmem>>, vector<16x256xbf16>
    %cst = arith.constant dense<0.000000e+00> : vector<8x256xf32>
    %2 = tpu.matmul %0, %1, %cst {dimension_numbers = #tpu.dot_dimension_numbers<[1], [0], [0], [1], [0, 0, 1, 1], [], []>} : vector<8x16xbf16>, vector<16x256xbf16>, vector<8x256xf32> -> vector<8x256xf32>
    %c0_3 = arith.constant 0 : index
    %c0_4 = arith.constant 0 : index
    %3 = vector.load %arg3[%c0_3, %c0_4] : memref<1x256xf32, #tpu.memory_space<vmem>>, vector<1x256xf32>
    %4 = vector.broadcast %3 : vector<1x256xf32> to vector<8x256xf32>
    %5 = arith.addf %2, %4 : vector<8x256xf32>
    %cst_5 = arith.constant 0.000000e+00 : f32
    %6 = vector.broadcast %cst_5 : f32 to vector<8x256xf32>
    %7 = arith.maximumf %5, %6 : vector<8x256xf32>
    %8 = arith.truncf %7 : vector<8x256xf32> to vector<8x256xbf16>
    %c0_6 = arith.constant 0 : index
    %c0_7 = arith.constant 0 : index
    %9 = vector.load %arg4[%c0_6, %c0_7] : memref<256x256xbf16, #tpu.memory_space<vmem>>, vector<256x256xbf16>
    %cst_8 = arith.constant dense<0.000000e+00> : vector<8x256xf32>
    %10 = tpu.matmul %8, %9, %cst_8 {dimension_numbers = #tpu.dot_dimension_numbers<[1], [0], [0], [1], [0, 0, 1, 1], [], []>} : vector<8x256xbf16>, vector<256x256xbf16>, vector<8x256xf32> -> vector<8x256xf32>
    %c0_9 = arith.constant 0 : index
    %c0_10 = arith.constant 0 : index
    %11 = vector.load %arg5[%c0_9, %c0_10] : memref<1x256xf32, #tpu.memory_space<vmem>>, vector<1x256xf32>
    %12 = vector.broadcast %11 : vector<1x256xf32> to vector<8x256xf32>
    %13 = arith.addf %10, %12 : vector<8x256xf32>
    %cst_11 = arith.constant 0.000000e+00 : f32
    %14 = vector.broadcast %cst_11 : f32 to vector<8x256xf32>
    %15 = arith.maximumf %13, %14 : vector<8x256xf32>
    %16 = arith.truncf %15 : vector<8x256xf32> to vector<8x256xbf16>
    %c0_12 = arith.constant 0 : index
    %c0_13 = arith.constant 0 : index
    %17 = vector.load %arg6[%c0_12, %c0_13] : memref<256x8xbf16, #tpu.memory_space<vmem>>, vector<256x8xbf16>
    %cst_14 = arith.constant dense<0.000000e+00> : vector<8x8xf32>
    %18 = tpu.matmul %16, %17, %cst_14 {dimension_numbers = #tpu.dot_dimension_numbers<[1], [0], [0], [1], [0, 0, 1, 1], [], []>} : vector<8x256xbf16>, vector<256x8xbf16>, vector<8x8xf32> -> vector<8x8xf32>
    %c0_15 = arith.constant 0 : index
    %c0_16 = arith.constant 0 : index
    %19 = vector.load %arg7[%c0_15, %c0_16] : memref<1x8xf32, #tpu.memory_space<vmem>>, vector<1x8xf32>
    %20 = vector.broadcast %19 : vector<1x8xf32> to vector<8x8xf32>
    %21 = arith.addf %18, %20 : vector<8x8xf32>
    %22 = tpu.iota {dimensions = array<i32: 1>} : vector<8x8xi32>
    %c4_i32 = arith.constant 4 : i32
    %23 = vector.broadcast %c4_i32 : i32 to vector<8x8xi32>
    %24 = arith.cmpi slt, %22, %23 : vector<8x8xi32>
    %cst_17 = arith.constant -1.000000e+30 : f32
    %25 = vector.broadcast %cst_17 : f32 to vector<8x8xf32>
    %26 = arith.select %24, %21, %25 : vector<8x8xi1>, vector<8x8xf32>
    %cst_18 = arith.constant dense<0xFF800000> : vector<8xf32>
    %27 = vector.multi_reduction <maximumf>, %26, %cst_18 [1] : vector<8x8xf32> to vector<8xf32>
    %28 = vector.shape_cast %27 : vector<8xf32> to vector<8x1xf32>
    %29 = vector.broadcast %28 : vector<8x1xf32> to vector<8x8xf32>
    %30 = arith.subf %26, %29 : vector<8x8xf32>
    %31 = math.exp %30 : vector<8x8xf32>
    %cst_19 = arith.constant dense<0.000000e+00> : vector<8xf32>
    %32 = vector.multi_reduction <add>, %31, %cst_19 [1] : vector<8x8xf32> to vector<8xf32>
    %33 = vector.shape_cast %32 : vector<8xf32> to vector<8x1xf32>
    %34 = vector.broadcast %33 : vector<8x1xf32> to vector<8x8xf32>
    %35 = arith.divf %31, %34 : vector<8x8xf32>
    %36 = arith.select %24, %35, %21 : vector<8x8xi1>, vector<8x8xf32>
    %c0_20 = arith.constant 0 : index
    %c0_21 = arith.constant 0 : index
    %37 = vector.load %arg8[%c0_20, %c0_21] : memref<8x8xf32, #tpu.memory_space<vmem>>, vector<8x8xf32>
    tpu.vector_store %arg8[%c0_20, %c0_21], %36 {strides = array<i32>} : memref<8x8xf32, #tpu.memory_space<vmem>>, vector<8x8xf32>,
    return
  }
  func.func @transform_0(%arg0: i32) -> (i32, i32) {
    %c0_i32 = arith.constant 0 : i32
    %c0_i32_0 = arith.constant 0 : i32
    return %arg0, %c0_i32 : i32, i32
  }
  func.func @transform_1(%arg0: i32) -> (i32, i32) {
    %c0_i32 = arith.constant 0 : i32
    %c0_i32_0 = arith.constant 0 : i32
    %c0_i32_1 = arith.constant 0 : i32
    return %c0_i32, %c0_i32_0 : i32, i32
  }
  func.func @transform_2(%arg0: i32) -> (i32, i32) {
    %c0_i32 = arith.constant 0 : i32
    %c0_i32_0 = arith.constant 0 : i32
    %c0_i32_1 = arith.constant 0 : i32
    return %c0_i32, %c0_i32_0 : i32, i32
  }
  func.func @transform_3(%arg0: i32) -> (i32, i32) {
    %c0_i32 = arith.constant 0 : i32
    %c0_i32_0 = arith.constant 0 : i32
    %c0_i32_1 = arith.constant 0 : i32
    return %c0_i32, %c0_i32_0 : i32, i32
  }
  func.func @transform_4(%arg0: i32) -> (i32, i32) {
    %c0_i32 = arith.constant 0 : i32
    %c0_i32_0 = arith.constant 0 : i32
    %c0_i32_1 = arith.constant 0 : i32
    return %c0_i32, %c0_i32_0 : i32, i32
  }
  func.func @transform_5(%arg0: i32) -> (i32, i32) {
    %c0_i32 = arith.constant 0 : i32
    %c0_i32_0 = arith.constant 0 : i32
    %c0_i32_1 = arith.constant 0 : i32
    return %c0_i32, %c0_i32_0 : i32, i32
  }
  func.func @transform_6(%arg0: i32) -> (i32, i32) {
    %c0_i32 = arith.constant 0 : i32
    %c0_i32_0 = arith.constant 0 : i32
    %c0_i32_1 = arith.constant 0 : i32
    return %c0_i32, %c0_i32_0 : i32, i32
  }
  func.func @transform_7(%arg0: i32) -> (i32, i32) {
    %c0_i32 = arith.constant 0 : i32
    %c0_i32_0 = arith.constant 0 : i32
    return %arg0, %c0_i32 : i32, i32
  }
}

</mosaic_0001>

<llo_original>
// kernel: tpu_custom_call.1
$region0: #{tpu_custom_call.1}
  #allocation0 [shape = 'u32[]', space=smem, size = 0x4, offset = 0x4, fixed_abs, tag = 'smem constant byte address 0x4 - core index']
  #allocation1 [shape = 'u32[144,128]{1,0:T(1,128)}', space=vmem, size = 0x12000, scoped, tag = 'internal scratch']
  %s0 = inlined_call_operand.vmem [shape: bf16[8,16], index: 0, kind: input, shape index: {}]
  %s1 = inlined_call_operand.vmem [shape: bf16[16,256], index: 1, kind: input, shape index: {}]
  %s2 = inlined_call_operand.vmem [shape: f32[1,256], index: 2, kind: input, shape index: {}]
  %s3 = inlined_call_operand.hbm [shape: bf16[256,256], index: 3, kind: input, shape index: {}]
  %s4 = inlined_call_operand.vmem [shape: f32[1,256], index: 4, kind: input, shape index: {}]
  %s5 = inlined_call_operand.vmem [shape: bf16[256,8], index: 5, kind: input, shape index: {}]
  %s6 = inlined_call_operand.vmem [shape: f32[1,8], index: 6, kind: input, shape index: {}]
  %s7 = inlined_call_operand.hbm [shape: f32[8,8], index: 7, kind: output, shape index: {}]
  %s8 = sld [smem:[#allocation0]]
  $region42: #{tpu_custom_call.1} parent=0
    _
  %s10 = ssub.s32 1, %s8
  %s11 = scalar_select 0, %s10, %s8
  $region1: #{tpu_custom_call.1} parent=0
    #allocation2 [shape = 'u8[131072]{0}', space=vmem, size = 0x20000, scoped, tag = 'input window, operand 3, single buffered']
    #allocation3 [shape = 's32[1]{0}', space=sflag, size = 0x4, scoped, tag = 'scoped memory for tpu_custom_call.1']
    #allocation4 [shape = 's32[1]{0}', space=sflag, size = 0x4, scoped, tag = 'scoped memory for tpu_custom_call.1']
    #allocation5 [shape = 'u8[4096]{0}', space=vmem, size = 0x1000, scoped, tag = 'output window, operand 0, single buffered']
    %12 = vsyncpa [#allocation3], 0
    %13 = vsyncpa [#allocation4], 0
    // Predicated region
    $region2: #{tpu_custom_call.1} parent=1 // pred_check
      _
    $region3: #{tpu_custom_call.1} parent=1 // pred_check_branch
      %15 = sbr.rel (0) target = $region5
    $region4: #{tpu_custom_call.1} parent=1 // pred_region
      _
    $region5: #{tpu_custom_call.1} parent=1 // pred_fallthru
      _
    // Predicated region
    $region6: #{tpu_custom_call.1} parent=1 // pred_check
      _
    $region7: #{tpu_custom_call.1} parent=1 // pred_check_branch
      %17 = sbr.rel (0) target = $region9
    $region8: #{tpu_custom_call.1} parent=1 // pred_region
      _
    $region9: #{tpu_custom_call.1} parent=1 // pred_fallthru
      _
    // Predicated region
    $region10: #{tpu_custom_call.1} parent=1 // pred_check
      _
    $region11: #{tpu_custom_call.1} parent=1 // pred_check_branch
      %19 = sbr.rel (0) target = $region13
    $region12: #{tpu_custom_call.1} parent=1 // pred_region
      _
    $region13: #{tpu_custom_call.1} parent=1 // pred_fallthru
      _
    // Predicated region
    $region14: #{tpu_custom_call.1} parent=1 // pred_check
      _
    $region15: #{tpu_custom_call.1} parent=1 // pred_check_branch
      %21 = sbr.rel (0) target = $region17
    $region16: #{tpu_custom_call.1} parent=1 // pred_region
      %s23 = ssub.s32 4096, 4096
      %24 = vsyncadd [#allocation3], %s23
      %s25 = sshll.u32 [#allocation2], 4
      %s26 = int_to_ptr.vmem [resolvable:$true] %s25
      %31 = dma.hbm_to_vmem [thread:$0]  %s3, 4096, %s26, [#allocation3], 128, 128, 8
    $region17: #{tpu_custom_call.1} parent=1 // pred_fallthru
      _
    // Predicated region
    $region18: #{tpu_custom_call.1} parent=1 // pred_check
      _
    $region19: #{tpu_custom_call.1} parent=1 // pred_check_branch
      %33 = sbr.rel (0) target = $region21
    $region20: #{tpu_custom_call.1} parent=1 // pred_region
      _
    $region21: #{tpu_custom_call.1} parent=1 // pred_fallthru
      _
    // Predicated region
    $region22: #{tpu_custom_call.1} parent=1 // pred_check
      _
    $region23: #{tpu_custom_call.1} parent=1 // pred_check_branch
      %35 = sbr.rel (0) target = $region25
    $region24: #{tpu_custom_call.1} parent=1 // pred_region
      _
    $region25: #{tpu_custom_call.1} parent=1 // pred_fallthru
      _
    // Predicated region
    $region26: #{tpu_custom_call.1} parent=1 // pred_check
      _
    $region27: #{tpu_custom_call.1} parent=1 // pred_check_branch
      %37 = sbr.rel (0) target = $region29
    $region28: #{tpu_custom_call.1} parent=1 // pred_region
      _
    $region29: #{tpu_custom_call.1} parent=1 // pred_fallthru
      _
    // Predicated region
    $region30: #{tpu_custom_call.1} parent=1 // pred_check
      _
    $region31: #{tpu_custom_call.1} parent=1 // pred_check_branch
      %39 = sbr.rel (0) target = $region33
    $region32: #{tpu_custom_call.1} parent=1 // pred_region
      %40 = dma.done [#allocation3], 4096
    $region33: #{tpu_custom_call.1} parent=1 // pred_fallthru
      _
    %v42 = vld [vmem:[%s0] sm:$0xf]
    %v43 = vld [vmem:[%s1] sm:$0xff]
    %v44 = vld [vmem:[%s1 + $0x8] sm:$0xff]
    %v45 = vld [vmem:[%s2] sm:$0x3]
    %v47 = vlaneseq
    %v48 = vshrl.u32 %v47, 7
    %v49 = vsub.s32 0, %v48
    %v50 = vrot.slane %v45, %v49
    %v51 = vlaneseq
    %v52 = vshrl.u32 %v51, 7
    %v53 = vsub.s32 1, %v52
    %v54 = vrot.slane %v45, %v53
    %v59 = vunpack.c.l.b16 %v43
    %v60 = vunpack.c.h.b16 %v43
    %v61 = vunpack.c.l.b16 %v44
    %v62 = vunpack.c.h.b16 %v44
    %v63 = vpack.c.b16 %v61, %v59
    %v64 = vpack.c.b16 %v62, %v60
    %vm67 = vcmask 130048
    %v69 = vsel %vm67, %v42, 0
    %71 = vmatprep.subr.bf16.mxu0 0
    %72 = vmatpush1.bf16.msra.mxu0 0
    %73 = vmatprep.subr.bf16.mxu0 0
    %74 = vmatpush1.bf16.msra.mxu0 0
    %75 = vmatprep.subr.bf16.mxu0 0
    %76 = vmatpush1.bf16.msra.mxu0 0
    %77 = vmatprep.subr.bf16.mxu0 0
    %78 = vmatpush1.bf16.msra.mxu0 0
    %79 = vmatprep.subr.bf16.mxu0 0
    %80 = vmatpush1.bf16.msra.mxu0 0
    %81 = vmatprep.subr.bf16.mxu0 0
    %82 = vmatpush1.bf16.msra.mxu0 0
    %83 = vmatprep.subr.bf16.mxu0 0
    %84 = vmatpush1.bf16.msra.mxu0 0
    %85 = vmatprep.subr.bf16.mxu0 %v64
    %86 = vmatpush1.bf16.msra.mxu0 %v63
    %87 = vmatprep.subr.bf16.mxu0 0
    %88 = vmatpush2.bf16.msra.mxu0 0
    %89 = vmatprep.subr.bf16.mxu0 0
    %90 = vmatpush2.bf16.msra.mxu0 0
    %91 = vmatprep.subr.bf16.mxu0 0
    %92 = vmatpush2.bf16.msra.mxu0 0
    %93 = vmatprep.subr.bf16.mxu0 0
    %94 = vmatpush2.bf16.msra.mxu0 0
    %95 = vmatprep.subr.bf16.mxu0 0
    %96 = vmatpush2.bf16.msra.mxu0 0
    %97 = vmatprep.subr.bf16.mxu0 0
    %98 = vmatpush2.bf16.msra.mxu0 0
    %99 = vmatprep.subr.bf16.mxu0 0
    %100 = vmatpush2.bf16.msra.mxu0 0
    %101 = vmatprep.subr.bf16.mxu0 0
    %102 = vmatpush2.bf16.msra.mxu0 0
    %103 = vmatprep.mubr.bf16.mxu0 0
    %104 = vmatmul.mubr.bf16.gmra.mxu0 %v69
    %v105 = vpop.f32.mrf.mxu0
    %v106 = vadd.f32 %v50, %v105
    %v107 = vpop.f32.mrf.mxu0
    %v108 = vadd.f32 %v54, %v107
    %v109 = vpop.f32.mrf.mxu0
    %v110 = vpop.f32.mrf.mxu0
    %111 = vdwg.mxu0
    %v112 = vmax.f32 %v106, 0.0
    %v113 = vmax.f32 %v108, 0.0
    %v114 = vpack.c.bf16 %v112, %v112
    %v115 = vpack.c.bf16 %v113, %v113
    %v116 = vld [vmem:[#allocation2] sm:$0xff]
    %v117 = vld [vmem:[#allocation2 + $0x8] sm:$0xff]
    %v118 = vld [vmem:[#allocation2 + $0x10] sm:$0xff]
    %v119 = vld [vmem:[#allocation2 + $0x18] sm:$0xff]
    %v120 = vld [vmem:[#allocation2 + $0x20] sm:$0xff]
    %v121 = vld [vmem:[#allocation2 + $0x28] sm:$0xff]
    %v122 = vld [vmem:[#allocation2 + $0x30] sm:$0xff]
    %v123 = vld [vmem:[#allocation2 + $0x38] sm:$0xff]
    %v124 = vld [vmem:[#allocation2 + $0x40] sm:$0xff]
    %v125 = vld [vmem:[#allocation2 + $0x48] sm:$0xff]
    %v126 = vld [vmem:[#allocation2 + $0x50] sm:$0xff]
    %v127 = vld [vmem:[#allocation2 + $0x58] sm:$0xff]
    %v128 = vld [vmem:[#allocation2 + $0x60] sm:$0xff]
    %v129 = vld [vmem:[#allocation2 + $0x68] sm:$0xff]
    %v130 = vld [vmem:[#allocation2 + $0x70] sm:$0xff]
    %v131 = vld [vmem:[#allocation2 + $0x78] sm:$0xff]
    %v132 = vld [vmem:[#allocation2 + $0x80] sm:$0xff]
    %v133 = vld [vmem:[#allocation2 + $0x88] sm:$0xff]
    %v134 = vld [vmem:[#allocation2 + $0x90] sm:$0xff]
    %v135 = vld [vmem:[#allocation2 + $0x98] sm:$0xff]
    %v136 = vld [vmem:[#allocation2 + $0xa0] sm:$0xff]
    %v137 = vld [vmem:[#allocation2 + $0xa8] sm:$0xff]
    %v138 = vld [vmem:[#allocation2 + $0xb0] sm:$0xff]
    %v139 = vld [vmem:[#allocation2 + $0xb8] sm:$0xff]
    %v140 = vld [vmem:[#allocation2 + $0xc0] sm:$0xff]
    %v141 = vld [vmem:[#allocation2 + $0xc8] sm:$0xff]
    %v142 = vld [vmem:[#allocation2 + $0xd0] sm:$0xff]
    %v143 = vld [vmem:[#allocation2 + $0xd8] sm:$0xff]
    %v144 = vld [vmem:[#allocation2 + $0xe0] sm:$0xff]
    %v145 = vld [vmem:[#allocation2 + $0xe8] sm:$0xff]
    %v146 = vld [vmem:[#allocation2 + $0xf0] sm:$0xff]
    %v147 = vld [vmem:[#allocation2 + $0xf8] sm:$0xff]
    %v148 = vld [vmem:[%s4] sm:$0x3]
    %v150 = vlaneseq
    %v151 = vshrl.u32 %v150, 7
    %v152 = vsub.s32 0, %v151
    %v153 = vrot.slane %v148, %v152
    %v154 = vlaneseq
    %v155 = vshrl.u32 %v154, 7
    %v156 = vsub.s32 1, %v155
    %v157 = vrot.slane %v148, %v156
    %v192 = vunpack.c.l.b16 %v116
    %v193 = vunpack.c.h.b16 %v116
    %v194 = vunpack.c.l.b16 %v117
    %v195 = vunpack.c.h.b16 %v117
    %v196 = vunpack.c.l.b16 %v118
    %v197 = vunpack.c.h.b16 %v118
    %v198 = vunpack.c.l.b16 %v119
    %v199 = vunpack.c.h.b16 %v119
    %v200 = vunpack.c.l.b16 %v120
    %v201 = vunpack.c.h.b16 %v120
    %v202 = vunpack.c.l.b16 %v121
    %v203 = vunpack.c.h.b16 %v121
    %v204 = vunpack.c.l.b16 %v122
    %v205 = vunpack.c.h.b16 %v122
    %v206 = vunpack.c.l.b16 %v123
    %v207 = vunpack.c.h.b16 %v123
    %v208 = vunpack.c.l.b16 %v124
    %v209 = vunpack.c.h.b16 %v124
    %v210 = vunpack.c.l.b16 %v125
    %v211 = vunpack.c.h.b16 %v125
    %v212 = vunpack.c.l.b16 %v126
    %v213 = vunpack.c.h.b16 %v126
    %v214 = vunpack.c.l.b16 %v127
    %v215 = vunpack.c.h.b16 %v127
    %v216 = vunpack.c.l.b16 %v128
    %v217 = vunpack.c.h.b16 %v128
    %v218 = vunpack.c.l.b16 %v129
    %v219 = vunpack.c.h.b16 %v129
    %v220 = vunpack.c.l.b16 %v130
    %v221 = vunpack.c.h.b16 %v130
    %v222 = vunpack.c.l.b16 %v131
    %v223 = vunpack.c.h.b16 %v131
    %v224 = vunpack.c.l.b16 %v132
    %v225 = vunpack.c.h.b16 %v132
    %v226 = vunpack.c.l.b16 %v133
    %v227 = vunpack.c.h.b16 %v133
    %v228 = vunpack.c.l.b16 %v134
    %v229 = vunpack.c.h.b16 %v134
    %v230 = vunpack.c.l.b16 %v135
    %v231 = vunpack.c.h.b16 %v135
    %v232 = vunpack.c.l.b16 %v136
    %v233 = vunpack.c.h.b16 %v136
    %v234 = vunpack.c.l.b16 %v137
    %v235 = vunpack.c.h.b16 %v137
    %v236 = vunpack.c.l.b16 %v138
    %v237 = vunpack.c.h.b16 %v138
    %v238 = vunpack.c.l.b16 %v139
    %v239 = vunpack.c.h.b16 %v139
    %v240 = vunpack.c.l.b16 %v140
    %v241 = vunpack.c.h.b16 %v140
    %v242 = vunpack.c.l.b16 %v141
    %v243 = vunpack.c.h.b16 %v141
    %v244 = vunpack.c.l.b16 %v142
    %v245 = vunpack.c.h.b16 %v142
    %v246 = vunpack.c.l.b16 %v143
    %v247 = vunpack.c.h.b16 %v143
    %v248 = vunpack.c.l.b16 %v144
    %v249 = vunpack.c.h.b16 %v144
    %v250 = vunpack.c.l.b16 %v145
    %v251 = vunpack.c.h.b16 %v145
    %v252 = vunpack.c.l.b16 %v146
    %v253 = vunpack.c.h.b16 %v146
    %v254 = vunpack.c.l.b16 %v147
    %v255 = vunpack.c.h.b16 %v147
    %v256 = vpack.c.b16 %v194, %v192
    %v257 = vpack.c.b16 %v195, %v193
    %v258 = vpack.c.b16 %v198, %v196
    %v259 = vpack.c.b16 %v199, %v197
    %v260 = vpack.c.b16 %v202, %v200
    %v261 = vpack.c.b16 %v203, %v201
    %v262 = vpack.c.b16 %v206, %v204
    %v263 = vpack.c.b16 %v207, %v205
    %v264 = vpack.c.b16 %v210, %v208
    %v265 = vpack.c.b16 %v211, %v209
    %v266 = vpack.c.b16 %v214, %v212
    %v267 = vpack.c.b16 %v215, %v213
    %v268 = vpack.c.b16 %v218, %v216
    %v269 = vpack.c.b16 %v219, %v217
    %v270 = vpack.c.b16 %v222, %v220
    %v271 = vpack.c.b16 %v223, %v221
    %v272 = vpack.c.b16 %v226, %v224
    %v273 = vpack.c.b16 %v227, %v225
    %v274 = vpack.c.b16 %v230, %v228
    %v275 = vpack.c.b16 %v231, %v229
    %v276 = vpack.c.b16 %v234, %v232
    %v277 = vpack.c.b16 %v235, %v233
    %v278 = vpack.c.b16 %v238, %v236
    %v279 = vpack.c.b16 %v239, %v237
    %v280 = vpack.c.b16 %v242, %v240
    %v281 = vpack.c.b16 %v243, %v241
    %v282 = vpack.c.b16 %v246, %v244
    %v283 = vpack.c.b16 %v247, %v245
    %v284 = vpack.c.b16 %v250, %v248
    %v285 = vpack.c.b16 %v251, %v249
    %v286 = vpack.c.b16 %v254, %v252
    %v287 = vpack.c.b16 %v255, %v253
    %320 = vmatprep.subr.bf16.mxu0 %v271
    %321 = vmatpush1.bf16.msra.mxu0 %v270
    %322 = vmatprep.subr.bf16.mxu0 %v269
    %323 = vmatpush1.bf16.msra.mxu0 %v268
    %324 = vmatprep.subr.bf16.mxu0 %v267
    %325 = vmatpush1.bf16.msra.mxu0 %v266
    %326 = vmatprep.subr.bf16.mxu0 %v265
    %327 = vmatpush1.bf16.msra.mxu0 %v264
    %328 = vmatprep.subr.bf16.mxu0 %v263
    %329 = vmatpush1.bf16.msra.mxu0 %v262
    %330 = vmatprep.subr.bf16.mxu0 %v261
    %331 = vmatpush1.bf16.msra.mxu0 %v260
    %332 = vmatprep.subr.bf16.mxu0 %v259
    %333 = vmatpush1.bf16.msra.mxu0 %v258
    %334 = vmatprep.subr.bf16.mxu0 %v257
    %335 = vmatpush1.bf16.msra.mxu0 %v256
    %336 = vmatprep.subr.bf16.mxu0 %v287
    %337 = vmatpush2.bf16.msra.mxu0 %v286
    %338 = vmatprep.subr.bf16.mxu0 %v285
    %339 = vmatpush2.bf16.msra.mxu0 %v284
    %340 = vmatprep.subr.bf16.mxu0 %v283
    %341 = vmatpush2.bf16.msra.mxu0 %v282
    %342 = vmatprep.subr.bf16.mxu0 %v281
    %343 = vmatpush2.bf16.msra.mxu0 %v280
    %344 = vmatprep.subr.bf16.mxu0 %v279
    %345 = vmatpush2.bf16.msra.mxu0 %v278
    %346 = vmatprep.subr.bf16.mxu0 %v277
    %347 = vmatpush2.bf16.msra.mxu0 %v276
    %348 = vmatprep.subr.bf16.mxu0 %v275
    %349 = vmatpush2.bf16.msra.mxu0 %v274
    %350 = vmatprep.subr.bf16.mxu0 %v273
    %351 = vmatpush2.bf16.msra.mxu0 %v272
    %352 = vmatprep.mubr.bf16.mxu0 %v115
    %353 = vmatmul.mubr.bf16.gmra.mxu0 %v114
    %v354 = vpop.f32.mrf.mxu0
    %v355 = vadd.f32 %v153, %v354
    %v356 = vpop.f32.mrf.mxu0
    %v357 = vadd.f32 %v157, %v356
    %v358 = vpop.f32.mrf.mxu0
    %v359 = vpop.f32.mrf.mxu0
    %360 = vdwg.mxu0
    %v361 = vmax.f32 %v355, 0.0
    %v362 = vmax.f32 %v357, 0.0
    %v363 = vpack.c.bf16 %v361, %v361
    %v364 = vpack.c.bf16 %v362, %v362
    %v365 = vld [vmem:[%s5] sm:$0xf]
    %v366 = vld [vmem:[%s5 + $0x4] sm:$0xf]
    %v367 = vld [vmem:[%s5 + $0x8] sm:$0xf]
    %v368 = vld [vmem:[%s5 + $0xc] sm:$0xf]
    %v369 = vld [vmem:[%s5 + $0x10] sm:$0xf]
    %v370 = vld [vmem:[%s5 + $0x14] sm:$0xf]
    %v371 = vld [vmem:[%s5 + $0x18] sm:$0xf]
    %v372 = vld [vmem:[%s5 + $0x1c] sm:$0xf]
    %v373 = vld [vmem:[%s5 + $0x20] sm:$0xf]
    %v374 = vld [vmem:[%s5 + $0x24] sm:$0xf]
    %v375 = vld [vmem:[%s5 + $0x28] sm:$0xf]
    %v376 = vld [vmem:[%s5 + $0x2c] sm:$0xf]
    %v377 = vld [vmem:[%s5 + $0x30] sm:$0xf]
    %v378 = vld [vmem:[%s5 + $0x34] sm:$0xf]
    %v379 = vld [vmem:[%s5 + $0x38] sm:$0xf]
    %v380 = vld [vmem:[%s5 + $0x3c] sm:$0xf]
    %v381 = vld [vmem:[%s5 + $0x40] sm:$0xf]
    %v382 = vld [vmem:[%s5 + $0x44] sm:$0xf]
    %v383 = vld [vmem:[%s5 + $0x48] sm:$0xf]
    %v384 = vld [vmem:[%s5 + $0x4c] sm:$0xf]
    %v385 = vld [vmem:[%s5 + $0x50] sm:$0xf]
    %v386 = vld [vmem:[%s5 + $0x54] sm:$0xf]
    %v387 = vld [vmem:[%s5 + $0x58] sm:$0xf]
    %v388 = vld [vmem:[%s5 + $0x5c] sm:$0xf]
    %v389 = vld [vmem:[%s5 + $0x60] sm:$0xf]
    %v390 = vld [vmem:[%s5 + $0x64] sm:$0xf]
    %v391 = vld [vmem:[%s5 + $0x68] sm:$0xf]
    %v392 = vld [vmem:[%s5 + $0x6c] sm:$0xf]
    %v393 = vld [vmem:[%s5 + $0x70] sm:$0xf]
    %v394 = vld [vmem:[%s5 + $0x74] sm:$0xf]
    %v395 = vld [vmem:[%s5 + $0x78] sm:$0xf]
    %v396 = vld [vmem:[%s5 + $0x7c] sm:$0xf]
    %v397 = vld [vmem:[%s6] sm:$0x1]
    %v399 = vlaneseq
    %v400 = vshrl.u32 %v399, 7
    %v401 = vsub.s32 0, %v400
    %v402 = vrot.slane %v397, %v401
    %v436 = vunpack.c.l.b16 %v365
    %v437 = vunpack.c.l.b16 %v366
    %v438 = vunpack.c.l.b16 %v367
    %v439 = vunpack.c.l.b16 %v368
    %v440 = vunpack.c.l.b16 %v369
    %v441 = vunpack.c.l.b16 %v370
    %v442 = vunpack.c.l.b16 %v371
    %v443 = vunpack.c.l.b16 %v372
    %v444 = vunpack.c.l.b16 %v373
    %v445 = vunpack.c.l.b16 %v374
    %v446 = vunpack.c.l.b16 %v375
    %v447 = vunpack.c.l.b16 %v376
    %v448 = vunpack.c.l.b16 %v377
    %v449 = vunpack.c.l.b16 %v378
    %v450 = vunpack.c.l.b16 %v379
    %v451 = vunpack.c.l.b16 %v380
    %v452 = vunpack.c.l.b16 %v381
    %v453 = vunpack.c.l.b16 %v382
    %v454 = vunpack.c.l.b16 %v383
    %v455 = vunpack.c.l.b16 %v384
    %v456 = vunpack.c.l.b16 %v385
    %v457 = vunpack.c.l.b16 %v386
    %v458 = vunpack.c.l.b16 %v387
    %v459 = vunpack.c.l.b16 %v388
    %v460 = vunpack.c.l.b16 %v389
    %v461 = vunpack.c.l.b16 %v390
    %v462 = vunpack.c.l.b16 %v391
    %v463 = vunpack.c.l.b16 %v392
    %v464 = vunpack.c.l.b16 %v393
    %v465 = vunpack.c.l.b16 %v394
    %v466 = vunpack.c.l.b16 %v395
    %v467 = vunpack.c.l.b16 %v396
    %v468 = vpack.c.b16 %v437, %v436
    %v469 = vpack.c.b16 %v439, %v438
    %v470 = vpack.c.b16 %v441, %v440
    %v471 = vpack.c.b16 %v443, %v442
    %v472 = vpack.c.b16 %v445, %v444
    %v473 = vpack.c.b16 %v447, %v446
    %v474 = vpack.c.b16 %v449, %v448
    %v475 = vpack.c.b16 %v451, %v450
    %v476 = vpack.c.b16 %v453, %v452
    %v477 = vpack.c.b16 %v455, %v454
    %v478 = vpack.c.b16 %v457, %v456
    %v479 = vpack.c.b16 %v459, %v458
    %v480 = vpack.c.b16 %v461, %v460
    %v481 = vpack.c.b16 %v463, %v462
    %v482 = vpack.c.b16 %v465, %v464
    %v483 = vpack.c.b16 %v467, %v466
    %500 = vmatprep.subr.bf16.mxu0 0
    %501 = vmatpush1.bf16.msra.mxu0 %v475
    %502 = vmatprep.subr.bf16.mxu0 0
    %503 = vmatpush1.bf16.msra.mxu0 %v474
    %504 = vmatprep.subr.bf16.mxu0 0
    %505 = vmatpush1.bf16.msra.mxu0 %v473
    %506 = vmatprep.subr.bf16.mxu0 0
    %507 = vmatpush1.bf16.msra.mxu0 %v472
    %508 = vmatprep.subr.bf16.mxu0 0
    %509 = vmatpush1.bf16.msra.mxu0 %v471
    %510 = vmatprep.subr.bf16.mxu0 0
    %511 = vmatpush1.bf16.msra.mxu0 %v470
    %512 = vmatprep.subr.bf16.mxu0 0
    %513 = vmatpush1.bf16.msra.mxu0 %v469
    %514 = vmatprep.subr.bf16.mxu0 0
    %515 = vmatpush1.bf16.msra.mxu0 %v468
    %516 = vmatprep.subr.bf16.mxu0 0
    %517 = vmatpush2.bf16.msra.mxu0 %v483
    %518 = vmatprep.subr.bf16.mxu0 0
    %519 = vmatpush2.bf16.msra.mxu0 %v482
    %520 = vmatprep.subr.bf16.mxu0 0
    %521 = vmatpush2.bf16.msra.mxu0 %v481
    %522 = vmatprep.subr.bf16.mxu0 0
    %523 = vmatpush2.bf16.msra.mxu0 %v480
    %524 = vmatprep.subr.bf16.mxu0 0
    %525 = vmatpush2.bf16.msra.mxu0 %v479
    %526 = vmatprep.subr.bf16.mxu0 0
    %527 = vmatpush2.bf16.msra.mxu0 %v478
    %528 = vmatprep.subr.bf16.mxu0 0
    %529 = vmatpush2.bf16.msra.mxu0 %v477
    %530 = vmatprep.subr.bf16.mxu0 0
    %531 = vmatpush2.bf16.msra.mxu0 %v476
    %532 = vmatprep.mubr.bf16.mxu0 %v364
    %533 = vmatmul.mubr.bf16.gmra.mxu0 %v363
    %v534 = vpop.f32.mrf.mxu0
    %v535 = vadd.f32 %v402, %v534
    %v536 = vpop.f32.mrf.mxu0
    %v537 = vpop.f32.mrf.mxu0
    %v538 = vpop.f32.mrf.mxu0
    %539 = vdwg.mxu0
    %v540 = vlaneseq
    %v541 = vand.u32 %v540, 127
    %vm542 = vcmp.lt.s32.totalorder %v541, 4
    %v543 = vsel %vm542, %v535, -1e+30
    %vm544 = vcmask 64512
    %v545 = vsel %vm544, %v543, -inf
    %546 = vmax.xlane.f32.xlu0 %v545
    %v547 = vpop.xlane.xlu0 %546
    %v548 = vsub.f32 %v543, %v547
    %v549 = vmul.f32 %v548, 1.442695
    %v550 = vpow.pop %v549
    %v551 = vsel %vm544, %v550, 0.0
    %552 = vadd.xlane.f32.xlu0 %v551
    %v553 = vpop.xlane.xlu0 %552
    %v554 = vrcp.pop %v553
    %v555 = vmul.f32 %v550, %v554
    %v556 = vsel %vm542, %v555, %v535
    %557 = vst.msk [vmem:[#allocation5] sm:$0xff] %vm544, %v556
    // Predicated region
    $region34: #{tpu_custom_call.1} parent=1 // pred_check
      _
    $region35: #{tpu_custom_call.1} parent=1 // pred_check_branch
      %559 = sbr.rel (0) target = $region37
    $region36: #{tpu_custom_call.1} parent=1 // pred_region
      %s561 = ssub.s32 128, 128
      %562 = vsyncadd [#allocation4], %s561
      %s564 = sshll.u32 [#allocation5], 4
      %s565 = int_to_ptr.vmem [resolvable:$true] %s564
      %567 = dma.vmem_to_hbm [thread:$0]  %s565, 128, %s7, [#allocation4]
    $region37: #{tpu_custom_call.1} parent=1 // pred_fallthru
      _
    // Predicated region
    $region38: #{tpu_custom_call.1} parent=1 // pred_check
      _
    $region39: #{tpu_custom_call.1} parent=1 // pred_check_branch
      %569 = sbr.rel (0) target = $region41
    $region40: #{tpu_custom_call.1} parent=1 // pred_region
      %570 = dma.done [#allocation4], 128
    $region41: #{tpu_custom_call.1} parent=1 // pred_fallthru
      _
    %571 = vsyncpa [#allocation3], 1
    %572 = vsyncpa [#allocation4], 1

</llo_original>
